<compile_context>
chip_gen: v7x
topology: tpu7x:2x2x1
jax: 0.10.0
libtpu: 0.0.40
codegen_flags: <defaults>
</compile_context>

<pallas_src>
import jax
import jax.numpy as jnp
from jax.experimental import pallas as pl
from jax.experimental.pallas import tpu as pltpu

# parameters dict from the original script (chosen small & consistent).
PARTS = 8
LATENT_SIZE = 16
IN_FEATS = 5
HIDDEN_SIZE = 32
NUM_CLASSES = 8
BATCH = 2
N_NODES = BATCH * PARTS  # reshape(-1, 1, parts, 5) requires N*in_feats = B*parts*5


# ------------------------------ fused Pallas kernel -------------------------

def _gcn_fused_kernel(a_hat_ref, adj_ref, x_ref, w1_ref, b1_ref, w2_ref, b2_ref,
                      wt_ref, ssum_ref, bl_ref, h_ref, skip_ref):
    f32 = jnp.float32
    adj = adj_ref[...]
    a_hat = a_hat_ref[...]

    # inputs = torch.mm(adj, inputs)
    agg = jnp.dot(adj, x_ref[...], preferred_element_type=f32)          # (N, 5)

    # h = relu(conv1(g, inputs))
    h = jnp.dot(agg, w1_ref[...], preferred_element_type=f32)           # (N, H)
    h = jnp.maximum(jnp.dot(a_hat, h, preferred_element_type=f32) + b1_ref[...],
                    0.0)
    # h = torch.mm(adj, h)
    h = jnp.dot(adj, h, preferred_element_type=f32)
    # h = relu(conv2(g, h))
    h = jnp.dot(h, w2_ref[...], preferred_element_type=f32)             # (N, C)
    h_ref[...] = jnp.maximum(
        jnp.dot(a_hat, h, preferred_element_type=f32) + b2_ref[...], 0.0)

    # ---- skip path, reading `agg` straight from VMEM ----
    # PyTorch:  flat[b, 4p+f] = wc*agg[parts*b + p, f] + bc  (f < 4),
    #           skip = flat @ wl_t + bl.
    # The conv3 scalar affine, the reshape and the slice are all folded into
    # the precomputed operands wt_eff / ssum / bl_eff (see wrapper):
    #   wt_eff[f, n, :] = wc * wl_t[4*(n % parts) + f, :]   (f = 0..3)
    #   ssum[b, n]      = 1.0 if n // parts == b else 0.0
    #   bl_eff          = bl + bc * sum_rows(wl_t)
    # so  skip = ssum @ (sum_f agg[:, f:f+1] * wt_eff[f]) + bl_eff  (exact).
    m = agg[:, 0:1] * wt_ref[0]
    for f in range(1, 4):
        m = m + agg[:, f:f + 1] * wt_ref[f]
    skip_ref[...] = (jnp.dot(ssum_ref[...], m, preferred_element_type=f32)
                     + bl_ref[...])


# ------------------------------ wrapper --------------------------------------

def _full_spec(shape):
    nd = len(shape)
    return pl.BlockSpec(shape, lambda *_: (0,) * nd)


def _gcn_fused_call(a_g_hat, adj, inputs, w1, b1, w2, b2, wt_eff, ssum, bl_eff):
    n, f_in = inputs.shape
    hid = w1.shape[1]
    ncls = w2.shape[1]
    b_dim = ssum.shape[0]
    out_l = bl_eff.shape[1]
    return pl.pallas_call(
        _gcn_fused_kernel,
        out_shape=(jax.ShapeDtypeStruct((n, ncls), jnp.float32),
                   jax.ShapeDtypeStruct((b_dim, out_l), jnp.float32)),
        grid=(1,),
        in_specs=[
            _full_spec((n, n)),          # a_hat
            _full_spec((n, n)),          # adj
            _full_spec((n, f_in)),       # inputs
            _full_spec((f_in, hid)),     # w1
            _full_spec((1, hid)),        # b1
            _full_spec((hid, ncls)),     # w2
            _full_spec((1, ncls)),       # b2
            _full_spec((4, n, out_l)),   # wt_eff (conv3-scaled tiled linear weight)
            _full_spec((b_dim, n)),      # ssum   (batch block-sum matrix)
            _full_spec((1, out_l)),      # bl_eff (bias with conv3 bias folded in)
        ],
        out_specs=(_full_spec((n, ncls)), _full_spec((b_dim, out_l))),
        compiler_params=pltpu.CompilerParams(
            dimension_semantics=("arbitrary",)),
    )(a_g_hat, adj, inputs, w1, b1, w2, b2, wt_eff, ssum, bl_eff)


@jax.jit
def gcn_forward(a_g_hat, inputs, adj, params):
    out_l = params["bl"].shape[1]
    # Fold the skip-path NCHW reshape/slice AND the conv3 scalar affine into
    # constant, parameter-side operands (done once on tiny tensors; the
    # activation path stays entirely in-kernel).
    wl3 = params["wl_t"].reshape(PARTS, 4, out_l)            # [p, f, o] = wl_t[4p+f, o]
    wt = jnp.tile(jnp.transpose(wl3, (1, 0, 2)), (1, BATCH, 1))    # (4, N, out_l)
    wt_eff = params["wc"][0, 0] * wt
    ssum = jnp.repeat(jnp.eye(BATCH, dtype=jnp.float32), PARTS, axis=1)  # (B, N)
    bl_eff = params["bl"] + params["bc"][0, 0] * jnp.sum(
        params["wl_t"], axis=0, keepdims=True)
    return _gcn_fused_call(a_g_hat, adj, inputs,
                           params["w1"], params["b1"],
                           params["w2"], params["b2"],
                           wt_eff, ssum, bl_eff)


# ------------------------------ params / graph -------------------------------

def init_params(key):
    ks = jax.random.split(key, 8)
    scale = 0.1
    return {
        # GraphConv1: in_feats -> hidden
        "w1": scale * jax.random.normal(ks[0], (IN_FEATS, HIDDEN_SIZE), jnp.float32),
        "b1": scale * jax.random.normal(ks[1], (1, HIDDEN_SIZE), jnp.float32),
        # GraphConv2: hidden -> num_classes
        "w2": scale * jax.random.normal(ks[2], (HIDDEN_SIZE, NUM_CLASSES), jnp.float32),
        "b2": scale * jax.random.normal(ks[3], (1, NUM_CLASSES), jnp.float32),
        # Conv2d(1, 1, kernel_size=1): scalar weight + scalar bias
        "wc": scale * jax.random.normal(ks[4], (1, 1), jnp.float32),
        "bc": scale * jax.random.normal(ks[5], (1, 1), jnp.float32),
        # nn.Linear(parts*4, 2*latent_size): stored pre-transposed (in, out)
        "wl_t": scale * jax.random.normal(ks[6], (PARTS * 4, 2 * LATENT_SIZE), jnp.float32),
        "bl": scale * jax.random.normal(ks[7], (1, 2 * LATENT_SIZE), jnp.float32),
    }


def make_graph_adjacency(n):
    # Deterministic ring graph standing in for DGL graph `g`, sym-normalized.
    idx = jnp.arange(n)
    a = (jnp.zeros((n, n), jnp.float32)
         .at[idx, (idx + 1) % n].set(1.0)
         .at[idx, (idx - 1) % n].set(1.0))
    deg = a.sum(axis=1)
    d_inv_sqrt = 1.0 / jnp.sqrt(deg)
    return a * d_inv_sqrt[:, None] * d_inv_sqrt[None, :]


# ------------------------------ pure-JAX reference ---------------------------

def gcn_reference(a_g_hat, inputs, adj, params):
    hi = jax.lax.Precision.HIGHEST
    agg = jnp.dot(adj, inputs, precision=hi)
    batched = agg.reshape(-1, 1, PARTS, 5)
    h = jnp.maximum(jnp.dot(a_g_hat, jnp.dot(agg, params["w1"], precision=hi),
                            precision=hi) + params["b1"], 0.0)
    h = jnp.dot(adj, h, precision=hi)
    h = jnp.maximum(jnp.dot(a_g_hat, jnp.dot(h, params["w2"], precision=hi),
                            precision=hi) + params["b2"], 0.0)
    conv = batched[:, :, :, :4] * params["wc"][0, 0] + params["bc"][0, 0]
    flat = conv.reshape(-1, 4 * PARTS)
    skip = jnp.dot(flat, params["wl_t"], precision=hi) + params["bl"]
    return h, skip


if __name__ == "__main__":
    key = jax.random.PRNGKey(0)
    k_param, k_x, k_adj = jax.random.split(key, 3)

    params = init_params(k_param)
    inputs = jax.random.normal(k_x, (N_NODES, IN_FEATS), jnp.float32)
    adj = jax.random.uniform(k_adj, (N_NODES, N_NODES), jnp.float32)
    a_g_hat = make_graph_adjacency(N_NODES)

    h, skip = gcn_forward(a_g_hat, inputs, adj, params)
    jax.block_until_ready((h, skip))

    assert h.shape == (N_NODES, NUM_CLASSES)
    assert skip.shape == (BATCH, 2 * LATENT_SIZE)

    h_ref, skip_ref = gcn_reference(a_g_hat, inputs, adj, params)
    assert jnp.allclose(h, h_ref, atol=2e-2, rtol=2e-2)
    assert jnp.allclose(skip, skip_ref, atol=2e-2, rtol=2e-2)

    print("KERNEL_OK")
</pallas_src>

<mosaic_0001>
module attributes {stable_mosaic.version = 11 : i64} {
  func.func @_gcn_fused_kernel(%arg0: i32, %arg1: memref<16x16xf32, #tpu.memory_space<vmem>>, %arg2: memref<16x16xf32, #tpu.memory_space<vmem>>, %arg3: memref<16x5xf32, #tpu.memory_space<vmem>>, %arg4: memref<5x32xf32, #tpu.memory_space<vmem>>, %arg5: memref<1x32xf32, #tpu.memory_space<vmem>>, %arg6: memref<32x8xf32, #tpu.memory_space<vmem>>, %arg7: memref<1x8xf32, #tpu.memory_space<vmem>>, %arg8: memref<4x16x32xf32, #tpu.memory_space<vmem>>, %arg9: memref<2x16xf32, #tpu.memory_space<vmem>>, %arg10: memref<1x32xf32, #tpu.memory_space<vmem>>, %arg11: memref<16x8xf32, #tpu.memory_space<vmem>>, %arg12: memref<2x32xf32, #tpu.memory_space<vmem>>) attributes {dimension_semantics = [#tpu.dimension_semantics<arbitrary>], iteration_bounds = array<i64: 1>, scalar_prefetch = 0 : i64, scratch_operands = 0 : i64, tpu.core_type = #tpu.core_type<tc>, window_params = [{pipeline_mode = #tpu.pipeline_mode<synchronous>, transform_indices = @transform_0, window_bounds = array<i64: 16, 16>}, {pipeline_mode = #tpu.pipeline_mode<synchronous>, transform_indices = @transform_1, window_bounds = array<i64: 16, 16>}, {pipeline_mode = #tpu.pipeline_mode<synchronous>, transform_indices = @transform_2, window_bounds = array<i64: 16, 5>}, {pipeline_mode = #tpu.pipeline_mode<synchronous>, transform_indices = @transform_3, window_bounds = array<i64: 5, 32>}, {pipeline_mode = #tpu.pipeline_mode<synchronous>, transform_indices = @transform_4, window_bounds = array<i64: 1, 32>}, {pipeline_mode = #tpu.pipeline_mode<synchronous>, transform_indices = @transform_5, window_bounds = array<i64: 32, 8>}, {pipeline_mode = #tpu.pipeline_mode<synchronous>, transform_indices = @transform_6, window_bounds = array<i64: 1, 8>}, {pipeline_mode = #tpu.pipeline_mode<synchronous>, transform_indices = @transform_7, window_bounds = array<i64: 4, 16, 32>}, {pipeline_mode = #tpu.pipeline_mode<synchronous>, transform_indices = @transform_8, window_bounds = array<i64: 2, 16>}, {pipeline_mode = #tpu.pipeline_mode<synchronous>, transform_indices = @transform_9, window_bounds = array<i64: 1, 32>}, {pipeline_mode = #tpu.pipeline_mode<synchronous>, transform_indices = @transform_10, window_bounds = array<i64: 16, 8>}, {pipeline_mode = #tpu.pipeline_mode<synchronous>, transform_indices = @transform_11, window_bounds = array<i64: 2, 32>}]} {
    %c0 = arith.constant 0 : index
    %c0_0 = arith.constant 0 : index
    %0 = vector.load %arg2[%c0, %c0_0] : memref<16x16xf32, #tpu.memory_space<vmem>>, vector<16x16xf32>
    %c0_1 = arith.constant 0 : index
    %c0_2 = arith.constant 0 : index
    %1 = vector.load %arg1[%c0_1, %c0_2] : memref<16x16xf32, #tpu.memory_space<vmem>>, vector<16x16xf32>
    %c0_3 = arith.constant 0 : index
    %c0_4 = arith.constant 0 : index
    %2 = vector.load %arg3[%c0_3, %c0_4] : memref<16x5xf32, #tpu.memory_space<vmem>>, vector<16x5xf32>
    %cst = arith.constant dense<0.000000e+00> : vector<16x5xf32>
    %3 = tpu.matmul %0, %2, %cst {dimension_numbers = #tpu.dot_dimension_numbers<[1], [0], [0], [1], [0, 0, 1, 1], [], []>} : vector<16x16xf32>, vector<16x5xf32>, vector<16x5xf32> -> vector<16x5xf32>
    %c0_5 = arith.constant 0 : index
    %c0_6 = arith.constant 0 : index
    %4 = vector.load %arg4[%c0_5, %c0_6] : memref<5x32xf32, #tpu.memory_space<vmem>>, vector<5x32xf32>
    %cst_7 = arith.constant dense<0.000000e+00> : vector<16x32xf32>
    %5 = tpu.matmul %3, %4, %cst_7 {dimension_numbers = #tpu.dot_dimension_numbers<[1], [0], [0], [1], [0, 0, 1, 1], [], []>} : vector<16x5xf32>, vector<5x32xf32>, vector<16x32xf32> -> vector<16x32xf32>
    %cst_8 = arith.constant dense<0.000000e+00> : vector<16x32xf32>
    %6 = tpu.matmul %1, %5, %cst_8 {dimension_numbers = #tpu.dot_dimension_numbers<[1], [0], [0], [1], [0, 0, 1, 1], [], []>} : vector<16x16xf32>, vector<16x32xf32>, vector<16x32xf32> -> vector<16x32xf32>
    %c0_9 = arith.constant 0 : index
    %c0_10 = arith.constant 0 : index
    %7 = vector.load %arg5[%c0_9, %c0_10] : memref<1x32xf32, #tpu.memory_space<vmem>>, vector<1x32xf32>
    %8 = vector.broadcast %7 : vector<1x32xf32> to vector<16x32xf32>
    %9 = arith.addf %6, %8 : vector<16x32xf32>
    %cst_11 = arith.constant 0.000000e+00 : f32
    %10 = vector.broadcast %cst_11 : f32 to vector<16x32xf32>
    %11 = arith.maximumf %9, %10 : vector<16x32xf32>
    %cst_12 = arith.constant dense<0.000000e+00> : vector<16x32xf32>
    %12 = tpu.matmul %0, %11, %cst_12 {dimension_numbers = #tpu.dot_dimension_numbers<[1], [0], [0], [1], [0, 0, 1, 1], [], []>} : vector<16x16xf32>, vector<16x32xf32>, vector<16x32xf32> -> vector<16x32xf32>
    %c0_13 = arith.constant 0 : index
    %c0_14 = arith.constant 0 : index
    %13 = vector.load %arg6[%c0_13, %c0_14] : memref<32x8xf32, #tpu.memory_space<vmem>>, vector<32x8xf32>
    %cst_15 = arith.constant dense<0.000000e+00> : vector<16x8xf32>
    %14 = tpu.matmul %12, %13, %cst_15 {dimension_numbers = #tpu.dot_dimension_numbers<[1], [0], [0], [1], [0, 0, 1, 1], [], []>} : vector<16x32xf32>, vector<32x8xf32>, vector<16x8xf32> -> vector<16x8xf32>
    %cst_16 = arith.constant dense<0.000000e+00> : vector<16x8xf32>
    %15 = tpu.matmul %1, %14, %cst_16 {dimension_numbers = #tpu.dot_dimension_numbers<[1], [0], [0], [1], [0, 0, 1, 1], [], []>} : vector<16x16xf32>, vector<16x8xf32>, vector<16x8xf32> -> vector<16x8xf32>
    %c0_17 = arith.constant 0 : index
    %c0_18 = arith.constant 0 : index
    %16 = vector.load %arg7[%c0_17, %c0_18] : memref<1x8xf32, #tpu.memory_space<vmem>>, vector<1x8xf32>
    %17 = vector.broadcast %16 : vector<1x8xf32> to vector<16x8xf32>
    %18 = arith.addf %15, %17 : vector<16x8xf32>
    %cst_19 = arith.constant 0.000000e+00 : f32
    %19 = vector.broadcast %cst_19 : f32 to vector<16x8xf32>
    %20 = arith.maximumf %18, %19 : vector<16x8xf32>
    %c0_20 = arith.constant 0 : index
    %c0_21 = arith.constant 0 : index
    %21 = vector.load %arg11[%c0_20, %c0_21] : memref<16x8xf32, #tpu.memory_space<vmem>>, vector<16x8xf32>
    tpu.vector_store %arg11[%c0_20, %c0_21], %20 {strides = array<i32>} : memref<16x8xf32, #tpu.memory_space<vmem>>, vector<16x8xf32>,
    %22 = vector.extract_strided_slice %3 {offsets = [0, 0], sizes = [16, 1], strides = [1, 1]} : vector<16x5xf32> to vector<16x1xf32>
    %c0_22 = arith.constant 0 : index
    %c0_23 = arith.constant 0 : index
    %c0_24 = arith.constant 0 : index
    %23 = vector.load %arg8[%c0_22, %c0_23, %c0_24] : memref<4x16x32xf32, #tpu.memory_space<vmem>>, vector<1x16x32xf32>
    %24 = vector.shape_cast %23 : vector<1x16x32xf32> to vector<16x32xf32>
    %25 = vector.broadcast %22 : vector<16x1xf32> to vector<16x32xf32>
    %26 = arith.mulf %25, %24 : vector<16x32xf32>
    %27 = vector.extract_strided_slice %3 {offsets = [0, 1], sizes = [16, 1], strides = [1, 1]} : vector<16x5xf32> to vector<16x1xf32>
    %c1 = arith.constant 1 : index
    %c0_25 = arith.constant 0 : index
    %c0_26 = arith.constant 0 : index
    %28 = vector.load %arg8[%c1, %c0_25, %c0_26] : memref<4x16x32xf32, #tpu.memory_space<vmem>>, vector<1x16x32xf32>
    %29 = vector.shape_cast %28 : vector<1x16x32xf32> to vector<16x32xf32>
    %30 = vector.broadcast %27 : vector<16x1xf32> to vector<16x32xf32>
    %31 = arith.mulf %30, %29 : vector<16x32xf32>
    %32 = arith.addf %26, %31 : vector<16x32xf32>
    %33 = vector.extract_strided_slice %3 {offsets = [0, 2], sizes = [16, 1], strides = [1, 1]} : vector<16x5xf32> to vector<16x1xf32>
    %c2 = arith.constant 2 : index
    %c0_27 = arith.constant 0 : index
    %c0_28 = arith.constant 0 : index
    %34 = vector.load %arg8[%c2, %c0_27, %c0_28] : memref<4x16x32xf32, #tpu.memory_space<vmem>>, vector<1x16x32xf32>
    %35 = vector.shape_cast %34 : vector<1x16x32xf32> to vector<16x32xf32>
    %36 = vector.broadcast %33 : vector<16x1xf32> to vector<16x32xf32>
    %37 = arith.mulf %36, %35 : vector<16x32xf32>
    %38 = arith.addf %32, %37 : vector<16x32xf32>
    %39 = vector.extract_strided_slice %3 {offsets = [0, 3], sizes = [16, 1], strides = [1, 1]} : vector<16x5xf32> to vector<16x1xf32>
    %c3 = arith.constant 3 : index
    %c0_29 = arith.constant 0 : index
    %c0_30 = arith.constant 0 : index
    %40 = vector.load %arg8[%c3, %c0_29, %c0_30] : memref<4x16x32xf32, #tpu.memory_space<vmem>>, vector<1x16x32xf32>
    %41 = vector.shape_cast %40 : vector<1x16x32xf32> to vector<16x32xf32>
    %42 = vector.broadcast %39 : vector<16x1xf32> to vector<16x32xf32>
    %43 = arith.mulf %42, %41 : vector<16x32xf32>
    %44 = arith.addf %38, %43 : vector<16x32xf32>
    %c0_31 = arith.constant 0 : index
    %c0_32 = arith.constant 0 : index
    %45 = vector.load %arg9[%c0_31, %c0_32] : memref<2x16xf32, #tpu.memory_space<vmem>>, vector<2x16xf32>
    %cst_33 = arith.constant dense<0.000000e+00> : vector<2x32xf32>
    %46 = tpu.matmul %45, %44, %cst_33 {dimension_numbers = #tpu.dot_dimension_numbers<[1], [0], [0], [1], [0, 0, 1, 1], [], []>} : vector<2x16xf32>, vector<16x32xf32>, vector<2x32xf32> -> vector<2x32xf32>
    %c0_34 = arith.constant 0 : index
    %c0_35 = arith.constant 0 : index
    %47 = vector.load %arg10[%c0_34, %c0_35] : memref<1x32xf32, #tpu.memory_space<vmem>>, vector<1x32xf32>
    %48 = vector.broadcast %47 : vector<1x32xf32> to vector<2x32xf32>
    %49 = arith.addf %46, %48 : vector<2x32xf32>
    %c0_36 = arith.constant 0 : index
    %c0_37 = arith.constant 0 : index
    %50 = vector.load %arg12[%c0_36, %c0_37] : memref<2x32xf32, #tpu.memory_space<vmem>>, vector<2x32xf32>
    tpu.vector_store %arg12[%c0_36, %c0_37], %49 {strides = array<i32>} : memref<2x32xf32, #tpu.memory_space<vmem>>, vector<2x32xf32>,
    return
  }
  func.func @transform_0(%arg0: i32) -> (i32, i32) {
    %c0_i32 = arith.constant 0 : i32
    %c0_i32_0 = arith.constant 0 : i32
    %c0_i32_1 = arith.constant 0 : i32
    return %c0_i32, %c0_i32_0 : i32, i32
  }
  func.func @transform_1(%arg0: i32) -> (i32, i32) {
    %c0_i32 = arith.constant 0 : i32
    %c0_i32_0 = arith.constant 0 : i32
    %c0_i32_1 = arith.constant 0 : i32
    return %c0_i32, %c0_i32_0 : i32, i32
  }
  func.func @transform_2(%arg0: i32) -> (i32, i32) {
    %c0_i32 = arith.constant 0 : i32
    %c0_i32_0 = arith.constant 0 : i32
    %c0_i32_1 = arith.constant 0 : i32
    return %c0_i32, %c0_i32_0 : i32, i32
  }
  func.func @transform_3(%arg0: i32) -> (i32, i32) {
    %c0_i32 = arith.constant 0 : i32
    %c0_i32_0 = arith.constant 0 : i32
    %c0_i32_1 = arith.constant 0 : i32
    return %c0_i32, %c0_i32_0 : i32, i32
  }
  func.func @transform_4(%arg0: i32) -> (i32, i32) {
    %c0_i32 = arith.constant 0 : i32
    %c0_i32_0 = arith.constant 0 : i32
    %c0_i32_1 = arith.constant 0 : i32
    return %c0_i32, %c0_i32_0 : i32, i32
  }
  func.func @transform_5(%arg0: i32) -> (i32, i32) {
    %c0_i32 = arith.constant 0 : i32
    %c0_i32_0 = arith.constant 0 : i32
    %c0_i32_1 = arith.constant 0 : i32
    return %c0_i32, %c0_i32_0 : i32, i32
  }
  func.func @transform_6(%arg0: i32) -> (i32, i32) {
    %c0_i32 = arith.constant 0 : i32
    %c0_i32_0 = arith.constant 0 : i32
    %c0_i32_1 = arith.constant 0 : i32
    return %c0_i32, %c0_i32_0 : i32, i32
  }
  func.func @transform_7(%arg0: i32) -> (i32, i32, i32) {
    %c0_i32 = arith.constant 0 : i32
    %c0_i32_0 = arith.constant 0 : i32
    %c0_i32_1 = arith.constant 0 : i32
    %c0_i32_2 = arith.constant 0 : i32
    return %c0_i32, %c0_i32_0, %c0_i32_1 : i32, i32, i32
  }
  func.func @transform_8(%arg0: i32) -> (i32, i32) {
    %c0_i32 = arith.constant 0 : i32
    %c0_i32_0 = arith.constant 0 : i32
    %c0_i32_1 = arith.constant 0 : i32
    return %c0_i32, %c0_i32_0 : i32, i32
  }
  func.func @transform_9(%arg0: i32) -> (i32, i32) {
    %c0_i32 = arith.constant 0 : i32
    %c0_i32_0 = arith.constant 0 : i32
    %c0_i32_1 = arith.constant 0 : i32
    return %c0_i32, %c0_i32_0 : i32, i32
  }
  func.func @transform_10(%arg0: i32) -> (i32, i32) {
    %c0_i32 = arith.constant 0 : i32
    %c0_i32_0 = arith.constant 0 : i32
    %c0_i32_1 = arith.constant 0 : i32
    return %c0_i32, %c0_i32_0 : i32, i32
  }
  func.func @transform_11(%arg0: i32) -> (i32, i32) {
    %c0_i32 = arith.constant 0 : i32
    %c0_i32_0 = arith.constant 0 : i32
    %c0_i32_1 = arith.constant 0 : i32
    return %c0_i32, %c0_i32_0 : i32, i32
  }
}

</mosaic_0001>

<llo_original>
// kernel: gcn_forward.1
$region0: #{gcn_forward.1}
  #allocation0 [shape = 'u32[]', space=smem, size = 0x4, offset = 0x4, fixed_abs, tag = 'smem constant byte address 0x4 - core index']
  #allocation1 [shape = 'u32[144,128]{1,0:T(1,128)}', space=vmem, size = 0x12000, scoped, tag = 'internal scratch']
  %s0 = inlined_call_operand.vmem [shape: f32[16,16], index: 0, kind: input, shape index: {}]
  %s1 = inlined_call_operand.vmem [shape: f32[16,16], index: 1, kind: input, shape index: {}]
  %s2 = inlined_call_operand.vmem [shape: f32[16,5], index: 2, kind: input, shape index: {}]
  %s3 = inlined_call_operand.vmem [shape: f32[5,32], index: 3, kind: input, shape index: {}]
  %s4 = inlined_call_operand.vmem [shape: f32[1,32], index: 4, kind: input, shape index: {}]
  %s5 = inlined_call_operand.vmem [shape: f32[32,8], index: 5, kind: input, shape index: {}]
  %s6 = inlined_call_operand.vmem [shape: f32[1,8], index: 6, kind: input, shape index: {}]
  %s7 = inlined_call_operand.vmem [shape: f32[4,16,32], index: 7, kind: input, shape index: {}]
  %s8 = inlined_call_operand.vmem [shape: f32[2,16], index: 8, kind: input, shape index: {}]
  %s9 = inlined_call_operand.vmem [shape: f32[1,32], index: 9, kind: input, shape index: {}]
  %s10 = inlined_call_operand.vmem [shape: f32[16,8], index: 10, kind: output, shape index: {0}]
  %s11 = inlined_call_operand.hbm [shape: f32[2,32], index: 11, kind: output, shape index: {1}]
  %12 = xla_tuple %s10, %s11
  %s13 = sld [smem:[#allocation0]]
  $region58: #{gcn_forward.1} parent=0
    _
  %s15 = ssub.s32 1, %s13
  %s16 = scalar_select 0, %s15, %s13
  $region1: #{gcn_forward.1} parent=0
    #allocation2 [shape = 'u8[1024]{0}', space=vmem, size = 0x400, scoped, tag = 'output window, operand 1, single buffered']
    #allocation3 [shape = 's32[1]{0}', space=sflag, size = 0x4, scoped, tag = 'scoped memory for gcn_forward.1']
    %17 = vsyncpa [#allocation3], 0
    // Predicated region
    $region2: #{gcn_forward.1} parent=1 // pred_check
      _
    $region3: #{gcn_forward.1} parent=1 // pred_check_branch
      %19 = sbr.rel (0) target = $region5
    $region4: #{gcn_forward.1} parent=1 // pred_region
      _
    $region5: #{gcn_forward.1} parent=1 // pred_fallthru
      _
    // Predicated region
    $region6: #{gcn_forward.1} parent=1 // pred_check
      _
    $region7: #{gcn_forward.1} parent=1 // pred_check_branch
      %21 = sbr.rel (0) target = $region9
    $region8: #{gcn_forward.1} parent=1 // pred_region
      _
    $region9: #{gcn_forward.1} parent=1 // pred_fallthru
      _
    // Predicated region
    $region10: #{gcn_forward.1} parent=1 // pred_check
      _
    $region11: #{gcn_forward.1} parent=1 // pred_check_branch
      %23 = sbr.rel (0) target = $region13
    $region12: #{gcn_forward.1} parent=1 // pred_region
      _
    $region13: #{gcn_forward.1} parent=1 // pred_fallthru
      _
    // Predicated region
    $region14: #{gcn_forward.1} parent=1 // pred_check
      _
    $region15: #{gcn_forward.1} parent=1 // pred_check_branch
      %25 = sbr.rel (0) target = $region17
    $region16: #{gcn_forward.1} parent=1 // pred_region
      _
    $region17: #{gcn_forward.1} parent=1 // pred_fallthru
      _
    // Predicated region
    $region18: #{gcn_forward.1} parent=1 // pred_check
      _
    $region19: #{gcn_forward.1} parent=1 // pred_check_branch
      %27 = sbr.rel (0) target = $region21
    $region20: #{gcn_forward.1} parent=1 // pred_region
      _
    $region21: #{gcn_forward.1} parent=1 // pred_fallthru
      _
    // Predicated region
    $region22: #{gcn_forward.1} parent=1 // pred_check
      _
    $region23: #{gcn_forward.1} parent=1 // pred_check_branch
      %29 = sbr.rel (0) target = $region25
    $region24: #{gcn_forward.1} parent=1 // pred_region
      _
    $region25: #{gcn_forward.1} parent=1 // pred_fallthru
      _
    // Predicated region
    $region26: #{gcn_forward.1} parent=1 // pred_check
      _
    $region27: #{gcn_forward.1} parent=1 // pred_check_branch
      %31 = sbr.rel (0) target = $region29
    $region28: #{gcn_forward.1} parent=1 // pred_region
      _
    $region29: #{gcn_forward.1} parent=1 // pred_fallthru
      _
    // Predicated region
    $region30: #{gcn_forward.1} parent=1 // pred_check
      _
    $region31: #{gcn_forward.1} parent=1 // pred_check_branch
      %33 = sbr.rel (0) target = $region33
    $region32: #{gcn_forward.1} parent=1 // pred_region
      _
    $region33: #{gcn_forward.1} parent=1 // pred_fallthru
      _
    // Predicated region
    $region34: #{gcn_forward.1} parent=1 // pred_check
      _
    $region35: #{gcn_forward.1} parent=1 // pred_check_branch
      %35 = sbr.rel (0) target = $region37
    $region36: #{gcn_forward.1} parent=1 // pred_region
      _
    $region37: #{gcn_forward.1} parent=1 // pred_fallthru
      _
    // Predicated region
    $region38: #{gcn_forward.1} parent=1 // pred_check
      _
    $region39: #{gcn_forward.1} parent=1 // pred_check_branch
      %37 = sbr.rel (0) target = $region41
    $region40: #{gcn_forward.1} parent=1 // pred_region
      _
    $region41: #{gcn_forward.1} parent=1 // pred_fallthru
      _
    %v38 = vld [vmem:[%s1] sm:$0xff]
    %v39 = vld [vmem:[%s1 + $0x8] sm:$0xff]
    %v40 = vld [vmem:[%s0] sm:$0xff]
    %v41 = vld [vmem:[%s0 + $0x8] sm:$0xff]
    %v42 = vld [vmem:[%s2] sm:$0xff]
    %v43 = vld [vmem:[%s2 + $0x8] sm:$0xff]
    %vm44 = vcmask 130048
    %v46 = vsel %vm44, %v38, 0
    %v49 = vsel %vm44, %v39, 0
    %51 = vmatprep.subr.mxu0 0.0
    %52 = vmatpush1.msra.mxu0 %v42
    %53 = vmatprep.subr.mxu0 0.0
    %54 = vmatpush1.msra.mxu0 %v43
    %55 = vmatprep.subr.mxu0 0.0
    %56 = vmatpush1.msra.mxu0 0.0
    %57 = vmatprep.subr.mxu0 0.0
    %58 = vmatpush1.msra.mxu0 0.0
    %59 = vmatprep.subr.mxu0 0.0
    %60 = vmatpush1.msra.mxu0 0.0
    %61 = vmatprep.subr.mxu0 0.0
    %62 = vmatpush1.msra.mxu0 0.0
    %63 = vmatprep.subr.mxu0 0.0
    %64 = vmatpush1.msra.mxu0 0.0
    %65 = vmatprep.subr.mxu0 0.0
    %66 = vmatpush1.msra.mxu0 0.0
    %67 = vmatprep.subr.mxu0 0.0
    %68 = vmatpush1.msra.mxu0 0.0
    %69 = vmatprep.subr.mxu0 0.0
    %70 = vmatpush1.msra.mxu0 0.0
    %71 = vmatprep.subr.mxu0 0.0
    %72 = vmatpush1.msra.mxu0 0.0
    %73 = vmatprep.subr.mxu0 0.0
    %74 = vmatpush1.msra.mxu0 0.0
    %75 = vmatprep.subr.mxu0 0.0
    %76 = vmatpush1.msra.mxu0 0.0
    %77 = vmatprep.subr.mxu0 0.0
    %78 = vmatpush1.msra.mxu0 0.0
    %79 = vmatprep.subr.mxu0 0.0
    %80 = vmatpush1.msra.mxu0 0.0
    %81 = vmatprep.subr.mxu0 0.0
    %82 = vmatpush1.msra.mxu0 0.0
    %83 = vmatprep.subr.mxu0 0.0
    %84 = vmatpush1.msra.mxu0 0.0
    %85 = vmatprep.subr.mxu0 0.0
    %86 = vmatpush1.msra.mxu0 0.0
    %87 = vmatprep.subr.mxu0 0.0
    %88 = vmatpush1.msra.mxu0 0.0
    %89 = vmatprep.subr.mxu0 0.0
    %90 = vmatpush1.msra.mxu0 0.0
    %91 = vmatprep.subr.mxu0 0.0
    %92 = vmatpush1.msra.mxu0 0.0
    %93 = vmatprep.subr.mxu0 0.0
    %94 = vmatpush1.msra.mxu0 0.0
    %95 = vmatprep.subr.mxu0 0.0
    %96 = vmatpush1.msra.mxu0 0.0
    %97 = vmatprep.subr.mxu0 0.0
    %98 = vmatpush1.msra.mxu0 0.0
    %99 = vmatprep.subr.mxu0 0.0
    %100 = vmatpush1.msra.mxu0 0.0
    %101 = vmatprep.subr.mxu0 0.0
    %102 = vmatpush1.msra.mxu0 0.0
    %103 = vmatprep.subr.mxu0 0.0
    %104 = vmatpush1.msra.mxu0 0.0
    %105 = vmatprep.subr.mxu0 0.0
    %106 = vmatpush1.msra.mxu0 0.0
    %107 = vmatprep.subr.mxu0 0.0
    %108 = vmatpush1.msra.mxu0 0.0
    %109 = vmatprep.subr.mxu0 0.0
    %110 = vmatpush1.msra.mxu0 0.0
    %111 = vmatprep.subr.mxu0 0.0
    %112 = vmatpush1.msra.mxu0 0.0
    %113 = vmatprep.subr.mxu0 0.0
    %114 = vmatpush1.msra.mxu0 0.0
    %115 = vmatprep.mubr.f32.mxu0 0.0
    %116 = vmatmul.mubr.f32.gmra.mrb[0].mxu0 %v46
    %v117 = vpop.f32.mrb[0].mxu0
    %v118 = vadd.f32 0.0, %v117
    %v119 = vpop.f32.mrb[0].mxu0
    %120 = vmatprep.mubr.f32.mxu0 0.0
    %121 = vmatmul.mubr.f32.gmra.mrb[0].mxu0 %v49
    %v122 = vpop.f32.mrb[0].mxu0
    %v123 = vadd.f32 0.0, %v122
    %v124 = vpop.f32.mrb[0].mxu0
    %125 = vdwg.mxu0
    %v126 = vld [vmem:[%s3] sm:$0x1f]
    %vm127 = vcmask 39936
    %v129 = vsel %vm127, %v118, 0
    %v132 = vsel %vm127, %v123, 0
    %vm134 = vcmask 1044480
    %v136 = vsel %vm134, %v126, 0
    %138 = vmatprep.subr.mxu0 0.0
    %139 = vmatpush1.msra.mxu0 %v136
    %140 = vmatprep.subr.mxu0 0.0
    %141 = vmatpush1.msra.mxu0 0.0
    %142 = vmatprep.subr.mxu0 0.0
    %143 = vmatpush1.msra.mxu0 0.0
    %144 = vmatprep.subr.mxu0 0.0
    %145 = vmatpush1.msra.mxu0 0.0
    %146 = vmatprep.subr.mxu0 0.0
    %147 = vmatpush1.msra.mxu0 0.0
    %148 = vmatprep.subr.mxu0 0.0
    %149 = vmatpush1.msra.mxu0 0.0
    %150 = vmatprep.subr.mxu0 0.0
    %151 = vmatpush1.msra.mxu0 0.0
    %152 = vmatprep.subr.mxu0 0.0
    %153 = vmatpush1.msra.mxu0 0.0
    %154 = vmatprep.subr.mxu0 0.0
    %155 = vmatpush1.msra.mxu0 0.0
    %156 = vmatprep.subr.mxu0 0.0
    %157 = vmatpush1.msra.mxu0 0.0
    %158 = vmatprep.subr.mxu0 0.0
    %159 = vmatpush1.msra.mxu0 0.0
    %160 = vmatprep.subr.mxu0 0.0
    %161 = vmatpush1.msra.mxu0 0.0
    %162 = vmatprep.subr.mxu0 0.0
    %163 = vmatpush1.msra.mxu0 0.0
    %164 = vmatprep.subr.mxu0 0.0
    %165 = vmatpush1.msra.mxu0 0.0
    %166 = vmatprep.subr.mxu0 0.0
    %167 = vmatpush1.msra.mxu0 0.0
    %168 = vmatprep.subr.mxu0 0.0
    %169 = vmatpush1.msra.mxu0 0.0
    %170 = vmatprep.subr.mxu0 0.0
    %171 = vmatpush1.msra.mxu0 0.0
    %172 = vmatprep.subr.mxu0 0.0
    %173 = vmatpush1.msra.mxu0 0.0
    %174 = vmatprep.subr.mxu0 0.0
    %175 = vmatpush1.msra.mxu0 0.0
    %176 = vmatprep.subr.mxu0 0.0
    %177 = vmatpush1.msra.mxu0 0.0
    %178 = vmatprep.subr.mxu0 0.0
    %179 = vmatpush1.msra.mxu0 0.0
    %180 = vmatprep.subr.mxu0 0.0
    %181 = vmatpush1.msra.mxu0 0.0
    %182 = vmatprep.subr.mxu0 0.0
    %183 = vmatpush1.msra.mxu0 0.0
    %184 = vmatprep.subr.mxu0 0.0
    %185 = vmatpush1.msra.mxu0 0.0
    %186 = vmatprep.subr.mxu0 0.0
    %187 = vmatpush1.msra.mxu0 0.0
    %188 = vmatprep.subr.mxu0 0.0
    %189 = vmatpush1.msra.mxu0 0.0
    %190 = vmatprep.subr.mxu0 0.0
    %191 = vmatpush1.msra.mxu0 0.0
    %192 = vmatprep.subr.mxu0 0.0
    %193 = vmatpush1.msra.mxu0 0.0
    %194 = vmatprep.subr.mxu0 0.0
    %195 = vmatpush1.msra.mxu0 0.0
    %196 = vmatprep.subr.mxu0 0.0
    %197 = vmatpush1.msra.mxu0 0.0
    %198 = vmatprep.subr.mxu0 0.0
    %199 = vmatpush1.msra.mxu0 0.0
    %200 = vmatprep.subr.mxu0 0.0
    %201 = vmatpush1.msra.mxu0 0.0
    %202 = vmatprep.mubr.f32.mxu0 0.0
    %203 = vmatmul.mubr.f32.gmra.mrb[0].mxu0 %v129
    %v204 = vpop.f32.mrb[0].mxu0
    %v205 = vadd.f32 0.0, %v204
    %v206 = vpop.f32.mrb[0].mxu0
    %207 = vmatprep.mubr.f32.mxu0 0.0
    %208 = vmatmul.mubr.f32.gmra.mrb[0].mxu0 %v132
    %v209 = vpop.f32.mrb[0].mxu0
    %v210 = vadd.f32 0.0, %v209
    %v211 = vpop.f32.mrb[0].mxu0
    %212 = vdwg.mxu0
    %v213 = vld [vmem:[%s4] sm:$0x1]
    %v215 = vlaneseq
    %v216 = vshrl.u32 %v215, 7
    %v217 = vsub.s32 0, %v216
    %v218 = vrot.slane %v213, %v217
    %v221 = vsel %vm44, %v40, 0
    %v224 = vsel %vm44, %v41, 0
    %226 = vmatprep.subr.mxu0 0.0
    %227 = vmatpush1.msra.mxu0 %v205
    %228 = vmatprep.subr.mxu0 0.0
    %229 = vmatpush1.msra.mxu0 %v210
    %230 = vmatprep.subr.mxu0 0.0
    %231 = vmatpush1.msra.mxu0 0.0
    %232 = vmatprep.subr.mxu0 0.0
    %233 = vmatpush1.msra.mxu0 0.0
    %234 = vmatprep.subr.mxu0 0.0
    %235 = vmatpush1.msra.mxu0 0.0
    %236 = vmatprep.subr.mxu0 0.0
    %237 = vmatpush1.msra.mxu0 0.0
    %238 = vmatprep.subr.mxu0 0.0
    %239 = vmatpush1.msra.mxu0 0.0
    %240 = vmatprep.subr.mxu0 0.0
    %241 = vmatpush1.msra.mxu0 0.0
    %242 = vmatprep.subr.mxu0 0.0
    %243 = vmatpush1.msra.mxu0 0.0
    %244 = vmatprep.subr.mxu0 0.0
    %245 = vmatpush1.msra.mxu0 0.0
    %246 = vmatprep.subr.mxu0 0.0
    %247 = vmatpush1.msra.mxu0 0.0
    %248 = vmatprep.subr.mxu0 0.0
    %249 = vmatpush1.msra.mxu0 0.0
    %250 = vmatprep.subr.mxu0 0.0
    %251 = vmatpush1.msra.mxu0 0.0
    %252 = vmatprep.subr.mxu0 0.0
    %253 = vmatpush1.msra.mxu0 0.0
    %254 = vmatprep.subr.mxu0 0.0
    %255 = vmatpush1.msra.mxu0 0.0
    %256 = vmatprep.subr.mxu0 0.0
    %257 = vmatpush1.msra.mxu0 0.0
    %258 = vmatprep.subr.mxu0 0.0
    %259 = vmatpush1.msra.mxu0 0.0
    %260 = vmatprep.subr.mxu0 0.0
    %261 = vmatpush1.msra.mxu0 0.0
    %262 = vmatprep.subr.mxu0 0.0
    %263 = vmatpush1.msra.mxu0 0.0
    %264 = vmatprep.subr.mxu0 0.0
    %265 = vmatpush1.msra.mxu0 0.0
    %266 = vmatprep.subr.mxu0 0.0
    %267 = vmatpush1.msra.mxu0 0.0
    %268 = vmatprep.subr.mxu0 0.0
    %269 = vmatpush1.msra.mxu0 0.0
    %270 = vmatprep.subr.mxu0 0.0
    %271 = vmatpush1.msra.mxu0 0.0
    %272 = vmatprep.subr.mxu0 0.0
    %273 = vmatpush1.msra.mxu0 0.0
    %274 = vmatprep.subr.mxu0 0.0
    %275 = vmatpush1.msra.mxu0 0.0
    %276 = vmatprep.subr.mxu0 0.0
    %277 = vmatpush1.msra.mxu0 0.0
    %278 = vmatprep.subr.mxu0 0.0
    %279 = vmatpush1.msra.mxu0 0.0
    %280 = vmatprep.subr.mxu0 0.0
    %281 = vmatpush1.msra.mxu0 0.0
    %282 = vmatprep.subr.mxu0 0.0
    %283 = vmatpush1.msra.mxu0 0.0
    %284 = vmatprep.subr.mxu0 0.0
    %285 = vmatpush1.msra.mxu0 0.0
    %286 = vmatprep.subr.mxu0 0.0
    %287 = vmatpush1.msra.mxu0 0.0
    %288 = vmatprep.subr.mxu0 0.0
    %289 = vmatpush1.msra.mxu0 0.0
    %290 = vmatprep.mubr.f32.mxu0 0.0
    %291 = vmatmul.mubr.f32.gmra.mrb[0].mxu0 %v221
    %v292 = vpop.f32.mrb[0].mxu0
    %v293 = vadd.f32 %v218, %v292
    %v294 = vpop.f32.mrb[0].mxu0
    %295 = vmatprep.mubr.f32.mxu0 0.0
    %296 = vmatmul.mubr.f32.gmra.mrb[0].mxu0 %v224
    %v297 = vpop.f32.mrb[0].mxu0
    %v298 = vadd.f32 %v218, %v297
    %v299 = vpop.f32.mrb[0].mxu0
    %300 = vdwg.mxu0
    %v301 = vmax.f32 %v293, 0.0
    %v302 = vmax.f32 %v298, 0.0
    %303 = vmatprep.subr.mxu0 0.0
    %304 = vmatpush1.msra.mxu0 %v301
    %305 = vmatprep.subr.mxu0 0.0
    %306 = vmatpush1.msra.mxu0 %v302
    %307 = vmatprep.subr.mxu0 0.0
    %308 = vmatpush1.msra.mxu0 0.0
    %309 = vmatprep.subr.mxu0 0.0
    %310 = vmatpush1.msra.mxu0 0.0
    %311 = vmatprep.subr.mxu0 0.0
    %312 = vmatpush1.msra.mxu0 0.0
    %313 = vmatprep.subr.mxu0 0.0
    %314 = vmatpush1.msra.mxu0 0.0
    %315 = vmatprep.subr.mxu0 0.0
    %316 = vmatpush1.msra.mxu0 0.0
    %317 = vmatprep.subr.mxu0 0.0
    %318 = vmatpush1.msra.mxu0 0.0
    %319 = vmatprep.subr.mxu0 0.0
    %320 = vmatpush1.msra.mxu0 0.0
    %321 = vmatprep.subr.mxu0 0.0
    %322 = vmatpush1.msra.mxu0 0.0
    %323 = vmatprep.subr.mxu0 0.0
    %324 = vmatpush1.msra.mxu0 0.0
    %325 = vmatprep.subr.mxu0 0.0
    %326 = vmatpush1.msra.mxu0 0.0
    %327 = vmatprep.subr.mxu0 0.0
    %328 = vmatpush1.msra.mxu0 0.0
    %329 = vmatprep.subr.mxu0 0.0
    %330 = vmatpush1.msra.mxu0 0.0
    %331 = vmatprep.subr.mxu0 0.0
    %332 = vmatpush1.msra.mxu0 0.0
    %333 = vmatprep.subr.mxu0 0.0
    %334 = vmatpush1.msra.mxu0 0.0
    %335 = vmatprep.subr.mxu0 0.0
    %336 = vmatpush1.msra.mxu0 0.0
    %337 = vmatprep.subr.mxu0 0.0
    %338 = vmatpush1.msra.mxu0 0.0
    %339 = vmatprep.subr.mxu0 0.0
    %340 = vmatpush1.msra.mxu0 0.0
    %341 = vmatprep.subr.mxu0 0.0
    %342 = vmatpush1.msra.mxu0 0.0
    %343 = vmatprep.subr.mxu0 0.0
    %344 = vmatpush1.msra.mxu0 0.0
    %345 = vmatprep.subr.mxu0 0.0
    %346 = vmatpush1.msra.mxu0 0.0
    %347 = vmatprep.subr.mxu0 0.0
    %348 = vmatpush1.msra.mxu0 0.0
    %349 = vmatprep.subr.mxu0 0.0
    %350 = vmatpush1.msra.mxu0 0.0
    %351 = vmatprep.subr.mxu0 0.0
    %352 = vmatpush1.msra.mxu0 0.0
    %353 = vmatprep.subr.mxu0 0.0
    %354 = vmatpush1.msra.mxu0 0.0
    %355 = vmatprep.subr.mxu0 0.0
    %356 = vmatpush1.msra.mxu0 0.0
    %357 = vmatprep.subr.mxu0 0.0
    %358 = vmatpush1.msra.mxu0 0.0
    %359 = vmatprep.subr.mxu0 0.0
    %360 = vmatpush1.msra.mxu0 0.0
    %361 = vmatprep.subr.mxu0 0.0
    %362 = vmatpush1.msra.mxu0 0.0
    %363 = vmatprep.subr.mxu0 0.0
    %364 = vmatpush1.msra.mxu0 0.0
    %365 = vmatprep.subr.mxu0 0.0
    %366 = vmatpush1.msra.mxu0 0.0
    %367 = vmatprep.mubr.f32.mxu0 0.0
    %368 = vmatmul.mubr.f32.gmra.mrb[0].mxu0 %v46
    %v369 = vpop.f32.mrb[0].mxu0
    %v370 = vadd.f32 0.0, %v369
    %v371 = vpop.f32.mrb[0].mxu0
    %372 = vmatprep.mubr.f32.mxu0 0.0
    %373 = vmatmul.mubr.f32.gmra.mrb[0].mxu0 %v49
    %v374 = vpop.f32.mrb[0].mxu0
    %v375 = vadd.f32 0.0, %v374
    %v376 = vpop.f32.mrb[0].mxu0
    %377 = vdwg.mxu0
    %v378 = vld [vmem:[%s5] sm:$0xff]
    %v379 = vld [vmem:[%s5 + $0x8] sm:$0xff]
    %v380 = vld [vmem:[%s5 + $0x10] sm:$0xff]
    %v381 = vld [vmem:[%s5 + $0x18] sm:$0xff]
    %vm382 = vcmask 261120
    %v384 = vsel %vm382, %v370, 0
    %v387 = vsel %vm382, %v375, 0
    %389 = vmatprep.subr.mxu0 0.0
    %390 = vmatpush1.msra.mxu0 %v378
    %391 = vmatprep.subr.mxu0 0.0
    %392 = vmatpush1.msra.mxu0 %v379
    %393 = vmatprep.subr.mxu0 0.0
    %394 = vmatpush1.msra.mxu0 %v380
    %395 = vmatprep.subr.mxu0 0.0
    %396 = vmatpush1.msra.mxu0 %v381
    %397 = vmatprep.subr.mxu0 0.0
    %398 = vmatpush1.msra.mxu0 0.0
    %399 = vmatprep.subr.mxu0 0.0
    %400 = vmatpush1.msra.mxu0 0.0
    %401 = vmatprep.subr.mxu0 0.0
    %402 = vmatpush1.msra.mxu0 0.0
    %403 = vmatprep.subr.mxu0 0.0
    %404 = vmatpush1.msra.mxu0 0.0
    %405 = vmatprep.subr.mxu0 0.0
    %406 = vmatpush1.msra.mxu0 0.0
    %407 = vmatprep.subr.mxu0 0.0
    %408 = vmatpush1.msra.mxu0 0.0
    %409 = vmatprep.subr.mxu0 0.0
    %410 = vmatpush1.msra.mxu0 0.0
    %411 = vmatprep.subr.mxu0 0.0
    %412 = vmatpush1.msra.mxu0 0.0
    %413 = vmatprep.subr.mxu0 0.0
    %414 = vmatpush1.msra.mxu0 0.0
    %415 = vmatprep.subr.mxu0 0.0
    %416 = vmatpush1.msra.mxu0 0.0
    %417 = vmatprep.subr.mxu0 0.0
    %418 = vmatpush1.msra.mxu0 0.0
    %419 = vmatprep.subr.mxu0 0.0
    %420 = vmatpush1.msra.mxu0 0.0
    %421 = vmatprep.subr.mxu0 0.0
    %422 = vmatpush1.msra.mxu0 0.0
    %423 = vmatprep.subr.mxu0 0.0
    %424 = vmatpush1.msra.mxu0 0.0
    %425 = vmatprep.subr.mxu0 0.0
    %426 = vmatpush1.msra.mxu0 0.0
    %427 = vmatprep.subr.mxu0 0.0
    %428 = vmatpush1.msra.mxu0 0.0
    %429 = vmatprep.subr.mxu0 0.0
    %430 = vmatpush1.msra.mxu0 0.0
    %431 = vmatprep.subr.mxu0 0.0
    %432 = vmatpush1.msra.mxu0 0.0
    %433 = vmatprep.subr.mxu0 0.0
    %434 = vmatpush1.msra.mxu0 0.0
    %435 = vmatprep.subr.mxu0 0.0
    %436 = vmatpush1.msra.mxu0 0.0
    %437 = vmatprep.subr.mxu0 0.0
    %438 = vmatpush1.msra.mxu0 0.0
    %439 = vmatprep.subr.mxu0 0.0
    %440 = vmatpush1.msra.mxu0 0.0
    %441 = vmatprep.subr.mxu0 0.0
    %442 = vmatpush1.msra.mxu0 0.0
    %443 = vmatprep.subr.mxu0 0.0
    %444 = vmatpush1.msra.mxu0 0.0
    %445 = vmatprep.subr.mxu0 0.0
    %446 = vmatpush1.msra.mxu0 0.0
    %447 = vmatprep.subr.mxu0 0.0
    %448 = vmatpush1.msra.mxu0 0.0
    %449 = vmatprep.subr.mxu0 0.0
    %450 = vmatpush1.msra.mxu0 0.0
    %451 = vmatprep.subr.mxu0 0.0
    %452 = vmatpush1.msra.mxu0 0.0
    %453 = vmatprep.mubr.f32.mxu0 0.0
    %454 = vmatmul.mubr.f32.gmra.mrb[0].mxu0 %v384
    %v455 = vpop.f32.mrb[0].mxu0
    %v456 = vadd.f32 0.0, %v455
    %v457 = vpop.f32.mrb[0].mxu0
    %458 = vmatprep.mubr.f32.mxu0 0.0
    %459 = vmatmul.mubr.f32.gmra.mrb[0].mxu0 %v387
    %v460 = vpop.f32.mrb[0].mxu0
    %v461 = vadd.f32 0.0, %v460
    %v462 = vpop.f32.mrb[0].mxu0
    %463 = vdwg.mxu0
    %v464 = vld [vmem:[%s6] sm:$0x1]
    %v466 = vlaneseq
    %v467 = vshrl.u32 %v466, 7
    %v468 = vsub.s32 0, %v467
    %v469 = vrot.slane %v464, %v468
    %471 = vmatprep.subr.mxu0 0.0
    %472 = vmatpush1.msra.mxu0 %v456
    %473 = vmatprep.subr.mxu0 0.0
    %474 = vmatpush1.msra.mxu0 %v461
    %475 = vmatprep.subr.mxu0 0.0
    %476 = vmatpush1.msra.mxu0 0.0
    %477 = vmatprep.subr.mxu0 0.0
    %478 = vmatpush1.msra.mxu0 0.0
    %479 = vmatprep.subr.mxu0 0.0
    %480 = vmatpush1.msra.mxu0 0.0
    %481 = vmatprep.subr.mxu0 0.0
    %482 = vmatpush1.msra.mxu0 0.0
    %483 = vmatprep.subr.mxu0 0.0
    %484 = vmatpush1.msra.mxu0 0.0
    %485 = vmatprep.subr.mxu0 0.0
    %486 = vmatpush1.msra.mxu0 0.0
    %487 = vmatprep.subr.mxu0 0.0
    %488 = vmatpush1.msra.mxu0 0.0
    %489 = vmatprep.subr.mxu0 0.0
    %490 = vmatpush1.msra.mxu0 0.0
    %491 = vmatprep.subr.mxu0 0.0
    %492 = vmatpush1.msra.mxu0 0.0
    %493 = vmatprep.subr.mxu0 0.0
    %494 = vmatpush1.msra.mxu0 0.0
    %495 = vmatprep.subr.mxu0 0.0
    %496 = vmatpush1.msra.mxu0 0.0
    %497 = vmatprep.subr.mxu0 0.0
    %498 = vmatpush1.msra.mxu0 0.0
    %499 = vmatprep.subr.mxu0 0.0
    %500 = vmatpush1.msra.mxu0 0.0
    %501 = vmatprep.subr.mxu0 0.0
    %502 = vmatpush1.msra.mxu0 0.0
    %503 = vmatprep.subr.mxu0 0.0
    %504 = vmatpush1.msra.mxu0 0.0
    %505 = vmatprep.subr.mxu0 0.0
    %506 = vmatpush1.msra.mxu0 0.0
    %507 = vmatprep.subr.mxu0 0.0
    %508 = vmatpush1.msra.mxu0 0.0
    %509 = vmatprep.subr.mxu0 0.0
    %510 = vmatpush1.msra.mxu0 0.0
    %511 = vmatprep.subr.mxu0 0.0
    %512 = vmatpush1.msra.mxu0 0.0
    %513 = vmatprep.subr.mxu0 0.0
    %514 = vmatpush1.msra.mxu0 0.0
    %515 = vmatprep.subr.mxu0 0.0
    %516 = vmatpush1.msra.mxu0 0.0
    %517 = vmatprep.subr.mxu0 0.0
    %518 = vmatpush1.msra.mxu0 0.0
    %519 = vmatprep.subr.mxu0 0.0
    %520 = vmatpush1.msra.mxu0 0.0
    %521 = vmatprep.subr.mxu0 0.0
    %522 = vmatpush1.msra.mxu0 0.0
    %523 = vmatprep.subr.mxu0 0.0
    %524 = vmatpush1.msra.mxu0 0.0
    %525 = vmatprep.subr.mxu0 0.0
    %526 = vmatpush1.msra.mxu0 0.0
    %527 = vmatprep.subr.mxu0 0.0
    %528 = vmatpush1.msra.mxu0 0.0
    %529 = vmatprep.subr.mxu0 0.0
    %530 = vmatpush1.msra.mxu0 0.0
    %531 = vmatprep.subr.mxu0 0.0
    %532 = vmatpush1.msra.mxu0 0.0
    %533 = vmatprep.subr.mxu0 0.0
    %534 = vmatpush1.msra.mxu0 0.0
    %535 = vmatprep.mubr.f32.mxu0 0.0
    %536 = vmatmul.mubr.f32.gmra.mrb[0].mxu0 %v221
    %v537 = vpop.f32.mrb[0].mxu0
    %v538 = vadd.f32 %v469, %v537
    %v539 = vpop.f32.mrb[0].mxu0
    %540 = vmatprep.mubr.f32.mxu0 0.0
    %541 = vmatmul.mubr.f32.gmra.mrb[0].mxu0 %v224
    %v542 = vpop.f32.mrb[0].mxu0
    %v543 = vadd.f32 %v469, %v542
    %v544 = vpop.f32.mrb[0].mxu0
    %545 = vdwg.mxu0
    %v546 = vmax.f32 %v538, 0.0
    %v547 = vmax.f32 %v543, 0.0
    %vm548 = vcmask 64512
    %549 = vst.msk [vmem:[%s10] sm:$0xff] %vm548, %v546
    %550 = vst.msk [vmem:[%s10 + $0x8] sm:$0xff] %vm548, %v547
    %v551 = vld [vmem:[%s7] sm:$0xff]
    %v552 = vld [vmem:[%s7 + $0x8] sm:$0xff]
    %553 = vset.pattern.permute.xlu0 0
    %554 = vperm.xlu0 %553, %v118
    %v555 = vpop.permute.xlu0 %554
    %557 = vset.pattern.permute.xlu0 0
    %558 = vperm.xlu0 %557, %v123
    %v559 = vpop.permute.xlu0 %558
    %v561 = vmul.f32 %v555, %v551
    %v562 = vmul.f32 %v559, %v552
    %s563 = scalar_lea.vmem %s7, 16
    %v564 = vld [vmem:[%s563] sm:$0xff]
    %v565 = vld [vmem:[%s563 + $0x8] sm:$0xff]
    %566 = vset.pattern.permute.xlu0 1
    %567 = vperm.xlu0 %566, %v118
    %v568 = vpop.permute.xlu0 %567
    %570 = vset.pattern.permute.xlu0 1
    %571 = vperm.xlu0 %570, %v123
    %v572 = vpop.permute.xlu0 %571
    %v574 = vmul.f32 %v568, %v564
    %v575 = vmul.f32 %v572, %v565
    %v576 = vadd.f32 %v561, %v574
    %v577 = vadd.f32 %v562, %v575
    %s578 = scalar_lea.vmem %s7, 32
    %v579 = vld [vmem:[%s578] sm:$0xff]
    %v580 = vld [vmem:[%s578 + $0x8] sm:$0xff]
    %581 = vset.pattern.permute.xlu0 2
    %582 = vperm.xlu0 %581, %v118
    %v583 = vpop.permute.xlu0 %582
    %585 = vset.pattern.permute.xlu0 2
    %586 = vperm.xlu0 %585, %v123
    %v587 = vpop.permute.xlu0 %586
    %v589 = vmul.f32 %v583, %v579
    %v590 = vmul.f32 %v587, %v580
    %v591 = vadd.f32 %v576, %v589
    %v592 = vadd.f32 %v577, %v590
    %s593 = scalar_lea.vmem %s7, 48
    %v594 = vld [vmem:[%s593] sm:$0xff]
    %v595 = vld [vmem:[%s593 + $0x8] sm:$0xff]
    %596 = vset.pattern.permute.xlu0 3
    %597 = vperm.xlu0 %596, %v118
    %v598 = vpop.permute.xlu0 %597
    %600 = vset.pattern.permute.xlu0 3
    %601 = vperm.xlu0 %600, %v123
    %v602 = vpop.permute.xlu0 %601
    %v604 = vmul.f32 %v598, %v594
    %v605 = vmul.f32 %v602, %v595
    %v606 = vadd.f32 %v591, %v604
    %v607 = vadd.f32 %v592, %v605
    %v608 = vld [vmem:[%s8] sm:$0x3]
    %v609 = vld [vmem:[%s9] sm:$0x1]
    %v611 = vlaneseq
    %v612 = vshrl.u32 %v611, 7
    %v613 = vsub.s32 0, %v612
    %v614 = vrot.slane %v609, %v613
    %v617 = vsel %vm44, %v608, 0
    %619 = vmatprep.subr.mxu0 0.0
    %620 = vmatpush1.msra.mxu0 %v606
    %621 = vmatprep.subr.mxu0 0.0
    %622 = vmatpush1.msra.mxu0 %v607
    %623 = vmatprep.subr.mxu0 0.0
    %624 = vmatpush1.msra.mxu0 0.0
    %625 = vmatprep.subr.mxu0 0.0
    %626 = vmatpush1.msra.mxu0 0.0
    %627 = vmatprep.subr.mxu0 0.0
    %628 = vmatpush1.msra.mxu0 0.0
    %629 = vmatprep.subr.mxu0 0.0
    %630 = vmatpush1.msra.mxu0 0.0
    %631 = vmatprep.subr.mxu0 0.0
    %632 = vmatpush1.msra.mxu0 0.0
    %633 = vmatprep.subr.mxu0 0.0
    %634 = vmatpush1.msra.mxu0 0.0
    %635 = vmatprep.subr.mxu0 0.0
    %636 = vmatpush1.msra.mxu0 0.0
    %637 = vmatprep.subr.mxu0 0.0
    %638 = vmatpush1.msra.mxu0 0.0
    %639 = vmatprep.subr.mxu0 0.0
    %640 = vmatpush1.msra.mxu0 0.0
    %641 = vmatprep.subr.mxu0 0.0
    %642 = vmatpush1.msra.mxu0 0.0
    %643 = vmatprep.subr.mxu0 0.0
    %644 = vmatpush1.msra.mxu0 0.0
    %645 = vmatprep.subr.mxu0 0.0
    %646 = vmatpush1.msra.mxu0 0.0
    %647 = vmatprep.subr.mxu0 0.0
    %648 = vmatpush1.msra.mxu0 0.0
    %649 = vmatprep.subr.mxu0 0.0
    %650 = vmatpush1.msra.mxu0 0.0
    %651 = vmatprep.subr.mxu0 0.0
    %652 = vmatpush1.msra.mxu0 0.0
    %653 = vmatprep.subr.mxu0 0.0
    %654 = vmatpush1.msra.mxu0 0.0
    %655 = vmatprep.subr.mxu0 0.0
    %656 = vmatpush1.msra.mxu0 0.0
    %657 = vmatprep.subr.mxu0 0.0
    %658 = vmatpush1.msra.mxu0 0.0
    %659 = vmatprep.subr.mxu0 0.0
    %660 = vmatpush1.msra.mxu0 0.0
    %661 = vmatprep.subr.mxu0 0.0
    %662 = vmatpush1.msra.mxu0 0.0
    %663 = vmatprep.subr.mxu0 0.0
    %664 = vmatpush1.msra.mxu0 0.0
    %665 = vmatprep.subr.mxu0 0.0
    %666 = vmatpush1.msra.mxu0 0.0
    %667 = vmatprep.subr.mxu0 0.0
    %668 = vmatpush1.msra.mxu0 0.0
    %669 = vmatprep.subr.mxu0 0.0
    %670 = vmatpush1.msra.mxu0 0.0
    %671 = vmatprep.subr.mxu0 0.0
    %672 = vmatpush1.msra.mxu0 0.0
    %673 = vmatprep.subr.mxu0 0.0
    %674 = vmatpush1.msra.mxu0 0.0
    %675 = vmatprep.subr.mxu0 0.0
    %676 = vmatpush1.msra.mxu0 0.0
    %677 = vmatprep.subr.mxu0 0.0
    %678 = vmatpush1.msra.mxu0 0.0
    %679 = vmatprep.subr.mxu0 0.0
    %680 = vmatpush1.msra.mxu0 0.0
    %681 = vmatprep.subr.mxu0 0.0
    %682 = vmatpush1.msra.mxu0 0.0
    %683 = vmatprep.mubr.f32.mxu0 0.0
    %684 = vmatmul.mubr.f32.gmra.mrb[0].mxu0 %v617
    %v685 = vpop.f32.mrb[0].mxu0
    %v686 = vadd.f32 %v614, %v685
    %v687 = vpop.f32.mrb[0].mxu0
    %688 = vdwg.mxu0
    %vm689 = vcmask 254976
    %690 = vst.msk [vmem:[#allocation2] sm:$0x3] %vm689, %v686
    // Predicated region
    $region42: #{gcn_forward.1} parent=1 // pred_check
      _
    $region43: #{gcn_forward.1} parent=1 // pred_check_branch
      %692 = sbr.rel (0) target = $region45
    $region44: #{gcn_forward.1} parent=1 // pred_region
      _
    $region45: #{gcn_forward.1} parent=1 // pred_fallthru
      _
    // Predicated region
    $region46: #{gcn_forward.1} parent=1 // pred_check
      _
    $region47: #{gcn_forward.1} parent=1 // pred_check_branch
      %694 = sbr.rel (0) target = $region49
    $region48: #{gcn_forward.1} parent=1 // pred_region
      %s696 = ssub.s32 32, 32
      %697 = vsyncadd [#allocation3], %s696
      %s699 = sshll.u32 [#allocation2], 4
      %s700 = int_to_ptr.vmem [resolvable:$true] %s699
      %702 = dma.vmem_to_hbm [thread:$0]  %s700, 32, %s11, [#allocation3]
    $region49: #{gcn_forward.1} parent=1 // pred_fallthru
      _
    // Predicated region
    $region50: #{gcn_forward.1} parent=1 // pred_check
      _
    $region51: #{gcn_forward.1} parent=1 // pred_check_branch
      %704 = sbr.rel (0) target = $region53
    $region52: #{gcn_forward.1} parent=1 // pred_region
      _
    $region53: #{gcn_forward.1} parent=1 // pred_fallthru
      _
    // Predicated region
    $region54: #{gcn_forward.1} parent=1 // pred_check
      _
    $region55: #{gcn_forward.1} parent=1 // pred_check_branch
      %706 = sbr.rel (0) target = $region57
    $region56: #{gcn_forward.1} parent=1 // pred_region
      %707 = dma.done [#allocation3], 32
    $region57: #{gcn_forward.1} parent=1 // pred_fallthru
      _
    %708 = vsyncpa [#allocation3], 1

</llo_original>
